<compile_context>
chip_gen: v6e
topology: v6e:2x2x1
jax: 0.10.0
libtpu: 0.0.40
codegen_flags: <defaults>
</compile_context>

<pallas_src>
import functools

import jax
import jax.numpy as jnp
from jax import lax
from jax.experimental import pallas as pl
from jax.experimental.pallas import tpu as pltpu

INF = 10000.0

_VMEM_BUDGET = 32 * 1024 * 1024   # target per-step working set (fits every gen)
_VMEM_LIMIT = 48 * 1024 * 1024    # scoped VMEM cap; below v7x's 64 MiB physical


def _round_up(x, mult):
    return ((x + mult - 1) // mult) * mult


def _footprint_bytes(bblk, tn, m, dim):
    # Rough per-grid-step live set (f32):
    #   out block (double-buffered) + raw/e intermediate   -> 3 * tn * m
    #   sparse block (double-buffered) + projected sparse  -> 3 * tn * dim
    #   dense block (double-buffered) + projected dense    -> 3 * m  * dim
    #   weights/bias/masks/slack                           -> ~1 MiB
    per_batch = 3 * tn * m + 3 * tn * dim + 3 * m * dim
    return 4 * bblk * per_batch + 4 * 3 * dim * dim + (1 << 20)


def _choose_tiling(b, n, m, dim, row_block=None):
    """Pick (bblk, tn, n_tiles): batch elems and sparse rows per grid step."""
    n8 = _round_up(n, 8)

    if row_block is not None:
        tn = min(_round_up(row_block, 8), n8)
    else:
        tn = min(n8, 512)
        while tn > 8 and _footprint_bytes(1, tn, m, dim) > _VMEM_BUDGET:
            tn = _round_up(max(tn // 2, 8), 8)
    n_tiles = -(-n8 // tn)

    divisors = [d for d in range(b, 0, -1) if b % d == 0]
    # Prefer the largest batch block that fits the VMEM budget while keeping
    # >= 4 total grid steps (>= 2 per TensorCore on v7x); fall back to the
    # largest that simply fits.
    for d in divisors:
        if _footprint_bytes(d, tn, m, dim) <= _VMEM_BUDGET and (b // d) * n_tiles >= 4:
            return d, tn, n_tiles
    for d in divisors:
        if _footprint_bytes(d, tn, m, dim) <= _VMEM_BUDGET:
            return d, tn, n_tiles
    return 1, tn, n_tiles


def _assign_kernel(sp_ref, dn_ref, w_ref, b_ref, m0_ref, m1_ref, out_ref, *,
                   extra_scale):
    # sp_ref : (Bblk, tn, dim)  sparse rows for this tile, dim on the lane axis
    # dn_ref : (Bblk, m,  dim)  all dense rows (block revisited across row tiles)
    # w_ref  : (dim, dim) = (W * sqrt(scale/temp)).T ; b_ref : (1, dim) scaled bias
    # m0_ref : (Bblk, tn, 1) int8 row mask ; m1_ref : (Bblk, 1, m) int8 col mask
    w = w_ref[...]
    bias = b_ref[...]

    # Conv1d(k=1) projections on the MXU (scale/temp folded into w & bias).
    sp = lax.dot_general(sp_ref[...], w, (((2,), (0,)), ((), ())),
                         preferred_element_type=jnp.float32) + bias
    dn = lax.dot_general(dn_ref[...], w, (((2,), (0,)), ((), ())),
                         preferred_element_type=jnp.float32) + bias

    # raw_attn = einsum('bnd,bmd->bnm') (scaling already folded in).
    raw = lax.dot_general(sp, dn, (((2,), (2,)), ((0,), (0,))),
                          preferred_element_type=jnp.float32)  # (Bblk, tn, m)
    if extra_scale != 1.0:           # only for pathological temp <= 0
        raw = raw * extra_scale

    # masked_fill_ "set" semantics (NOT additive) so fully-masked rows degrade
    # to a uniform softmax exactly like the PyTorch reference.
    raw = jnp.where(m0_ref[...] != 0, raw, -INF)
    raw = jnp.where(m1_ref[...] != 0, raw, -INF)

    # Row softmax over m.  Exact divide: the kernel is HBM-bound, so the divide
    # is hidden for free and rows sum to exactly 1.
    mx = jnp.max(raw, axis=-1, keepdims=True)
    e = jnp.exp(raw - mx)
    s = jnp.sum(e, axis=-1, keepdims=True)
    out_ref[...] = e / s


def assign_forward(sparse, dense, proj_w, proj_b, temp, mask0=None, mask1=None,
                   row_block=None):
    """sparse: (b, dim, n) f32; dense: (b, dim, m) f32.
    proj_w: (dim, dim), proj_b: (dim,)  -- shared Conv1d(k=1) projection.
    mask0: (b, n) bool or None; mask1: (b, m) bool or None.
    Returns soft_attn: (b, n, m) f32 (no wrapper-side slicing)."""
    b, dim, n = sparse.shape
    m = dense.shape[2]

    if mask0 is None:
        mask0 = jnp.ones((b, n), dtype=jnp.int8)
    if mask1 is None:
        mask1 = jnp.ones((b, m), dtype=jnp.int8)

    bblk, tn, n_tiles = _choose_tiling(b, n, m, dim, row_block)
    n_padded = tn * n_tiles

    sparse = sparse.astype(jnp.float32)
    dense = dense.astype(jnp.float32)
    if n_padded != n:
        sparse = jnp.pad(sparse, ((0, 0), (0, 0), (0, n_padded - n)))

    # Layout plumbing in the wrapper (cheap: (n+m)*dim elems vs the n*m output):
    # put `dim` on the lane axis so the kernel needs no transposes.
    sparse_t = jnp.transpose(sparse, (0, 2, 1))     # (b, n_padded, dim)
    dense_t = jnp.transpose(dense, (0, 2, 1))       # (b, m, dim)

    # Fold scale/temp into the shared projection: sqrt(c) on each operand.
    c = (float(dim) ** -0.5) / float(temp)
    if c > 0.0:
        cs = c ** 0.5
        w_k = (proj_w.astype(jnp.float32) * cs).T                  # (dim_in, dim_out)
        b_k = (proj_b.astype(jnp.float32) * cs).reshape(1, dim)
        extra_scale = 1.0
    else:  # negative/zero learnable temp: keep the factor in-kernel
        w_k = proj_w.astype(jnp.float32).T
        b_k = proj_b.astype(jnp.float32).reshape(1, dim)
        extra_scale = c

    m0 = mask0.astype(jnp.int8)
    m1 = mask1.astype(jnp.int8)
    if n_padded != n:
        m0 = jnp.pad(m0, ((0, 0), (0, n_padded - n)))   # padded rows masked out
    m0 = m0.reshape(b, n_padded, 1)
    m1 = m1.reshape(b, 1, m)

    grid = (b // bblk, n_tiles)
    kernel = functools.partial(_assign_kernel, extra_scale=extra_scale)

    out = pl.pallas_call(
        kernel,
        out_shape=jax.ShapeDtypeStruct((b, n, m), jnp.float32),
        grid_spec=pltpu.PrefetchScalarGridSpec(
            num_scalar_prefetch=0,
            grid=grid,
            in_specs=[
                pl.BlockSpec((bblk, tn, dim), lambda i, j: (i, j, 0)),   # sparse rows
                pl.BlockSpec((bblk, m, dim), lambda i, j: (i, 0, 0)),    # dense (revisited)
                pl.BlockSpec((dim, dim), lambda i, j: (0, 0)),           # scaled W^T
                pl.BlockSpec((1, dim), lambda i, j: (0, 0)),             # scaled bias row
                pl.BlockSpec((bblk, tn, 1), lambda i, j: (i, j, 0)),     # mask0 (int8)
                pl.BlockSpec((bblk, 1, m), lambda i, j: (i, 0, 0)),      # mask1 (int8)
            ],
            # Last two block dims are (tn % 8 == 0, full m) -> legal; the row
            # edge past n is handled by masked stores (no wrapper slice copy).
            out_specs=pl.BlockSpec((bblk, tn, m), lambda i, j: (i, j, 0)),
        ),
        compiler_params=pltpu.CompilerParams(
            dimension_semantics=("parallel", "parallel"),
            vmem_limit_bytes=_VMEM_LIMIT),
    )(sparse_t, dense_t, w_k, b_k, m0, m1)

    return out


def _reference(sparse, dense, proj_w, proj_b, temp, mask0, mask1):
    # pure-JAX reference of the torch forward pass
    dim = sparse.shape[1]
    scale = float(dim) ** (-0.5)
    proj = lambda x: jnp.einsum('oc,bcn->bon', proj_w, x) + proj_b[None, :, None]
    sp, dn = proj(sparse), proj(dense)
    raw = scale * jnp.einsum('bdn,bdm->bnm', sp, dn) / temp
    raw = jnp.where(mask0[:, :, None], raw, -INF)
    raw = jnp.where(mask1[:, None, :], raw, -INF)
    return jax.nn.softmax(raw, axis=2)


def _run_case(key, b, dim, n, m, temp, use_mask0=True, row_block=None):
    k1, k2, k3, k4, k5, k6 = jax.random.split(key, 6)
    sparse = jax.random.normal(k1, (b, dim, n), dtype=jnp.float32)
    dense = jax.random.normal(k2, (b, dim, m), dtype=jnp.float32)
    proj_w = jax.random.normal(k3, (dim, dim), dtype=jnp.float32) * (dim ** -0.5)
    proj_b = jax.random.normal(k4, (dim,), dtype=jnp.float32) * 0.02
    mask0 = (jax.random.uniform(k5, (b, n)) > 0.2) if use_mask0 else None
    mask1 = jax.random.uniform(k6, (b, m)) > 0.2

    out = assign_forward(sparse, dense, proj_w, proj_b, temp, mask0, mask1,
                         row_block=row_block)
    out = jax.block_until_ready(out)

    m0_ref = mask0 if mask0 is not None else jnp.ones((b, n), dtype=bool)
    ref = _reference(sparse, dense, proj_w, proj_b, temp, m0_ref, mask1)
    assert out.shape == (b, n, m)
    # exact softmax division -> tight tolerance
    assert jnp.allclose(out, ref, atol=1e-4, rtol=1e-4)


if __name__ == "__main__":
    key = jax.random.PRNGKey(0)
    ka, kb, kc = jax.random.split(key, 3)

    # module config: dim=32, learnable_temp=True -> temp initialized to 0.1
    _run_case(ka, b=2, dim=32, n=16, m=24, temp=0.1, use_mask0=True)
    # batch blocking (bblk=2, grid=(4,1)) and row padding (n=20 -> 24)
    _run_case(kb, b=8, dim=48, n=20, m=40, temp=1.0, use_mask0=False)
    # exercise the row-tiled grid axis (tn=8 -> 3 row tiles, partial edge store)
    _run_case(kc, b=2, dim=32, n=20, m=24, temp=0.1, use_mask0=True, row_block=8)

    print("KERNEL_OK")
</pallas_src>

<mosaic_0001>
module attributes {stable_mosaic.version = 11 : i64} {
  func.func @_assign_kernel(%arg0: i32, %arg1: i32, %arg2: memref<2x16x32xf32, #tpu.memory_space<vmem>>, %arg3: memref<2x24x32xf32, #tpu.memory_space<vmem>>, %arg4: memref<32x32xf32, #tpu.memory_space<vmem>>, %arg5: memref<1x32xf32, #tpu.memory_space<vmem>>, %arg6: memref<2x16x1xi8, #tpu.memory_space<vmem>>, %arg7: memref<2x1x24xi8, #tpu.memory_space<vmem>>, %arg8: memref<2x16x24xf32, #tpu.memory_space<vmem>>) attributes {dimension_semantics = [#tpu.dimension_semantics<parallel>, #tpu.dimension_semantics<parallel>], iteration_bounds = array<i64: 1, 1>, scalar_prefetch = 0 : i64, scratch_operands = 0 : i64, tpu.core_type = #tpu.core_type<tc>, window_params = [{transform_indices = @transform_0, window_bounds = array<i64: 2, 16, 32>}, {transform_indices = @transform_1, window_bounds = array<i64: 2, 24, 32>}, {pipeline_mode = #tpu.pipeline_mode<synchronous>, transform_indices = @transform_2, window_bounds = array<i64: 32, 32>}, {pipeline_mode = #tpu.pipeline_mode<synchronous>, transform_indices = @transform_3, window_bounds = array<i64: 1, 32>}, {transform_indices = @transform_4, window_bounds = array<i64: 2, 16, 1>}, {transform_indices = @transform_5, window_bounds = array<i64: 2, 1, 24>}, {transform_indices = @transform_6, window_bounds = array<i64: 2, 16, 24>}]} {
    %c0 = arith.constant 0 : index
    %c0_0 = arith.constant 0 : index
    %0 = vector.load %arg4[%c0, %c0_0] : memref<32x32xf32, #tpu.memory_space<vmem>>, vector<32x32xf32>
    %c0_1 = arith.constant 0 : index
    %c0_2 = arith.constant 0 : index
    %1 = vector.load %arg5[%c0_1, %c0_2] : memref<1x32xf32, #tpu.memory_space<vmem>>, vector<1x32xf32>
    %c0_3 = arith.constant 0 : index
    %c0_4 = arith.constant 0 : index
    %c0_5 = arith.constant 0 : index
    %2 = vector.load %arg2[%c0_3, %c0_4, %c0_5] : memref<2x16x32xf32, #tpu.memory_space<vmem>>, vector<2x16x32xf32>
    %cst = arith.constant dense<0.000000e+00> : vector<2x16x32xf32>
    %3 = tpu.matmul %2, %0, %cst {dimension_numbers = #tpu.dot_dimension_numbers<[2], [0], [0, 1], [1], [0, 0, 0, 1, 1, 1], [], []>} : vector<2x16x32xf32>, vector<32x32xf32>, vector<2x16x32xf32> -> vector<2x16x32xf32>
    %4 = vector.shape_cast %1 : vector<1x32xf32> to vector<1x1x32xf32>
    %5 = vector.broadcast %4 : vector<1x1x32xf32> to vector<2x16x32xf32>
    %6 = arith.addf %3, %5 : vector<2x16x32xf32>
    %c0_6 = arith.constant 0 : index
    %c0_7 = arith.constant 0 : index
    %c0_8 = arith.constant 0 : index
    %7 = vector.load %arg3[%c0_6, %c0_7, %c0_8] : memref<2x24x32xf32, #tpu.memory_space<vmem>>, vector<2x24x32xf32>
    %cst_9 = arith.constant dense<0.000000e+00> : vector<2x24x32xf32>
    %8 = tpu.matmul %7, %0, %cst_9 {dimension_numbers = #tpu.dot_dimension_numbers<[2], [0], [0, 1], [1], [0, 0, 0, 1, 1, 1], [], []>} : vector<2x24x32xf32>, vector<32x32xf32>, vector<2x24x32xf32> -> vector<2x24x32xf32>
    %9 = vector.shape_cast %1 : vector<1x32xf32> to vector<1x1x32xf32>
    %10 = vector.broadcast %9 : vector<1x1x32xf32> to vector<2x24x32xf32>
    %11 = arith.addf %8, %10 : vector<2x24x32xf32>
    %cst_10 = arith.constant dense<0.000000e+00> : vector<2x16x24xf32>
    %12 = tpu.matmul %6, %11, %cst_10 {dimension_numbers = #tpu.dot_dimension_numbers<[2], [2], [1], [1], [0, 0, 0, 1, 1, 1], [0], [0]>} : vector<2x16x32xf32>, vector<2x24x32xf32>, vector<2x16x24xf32> -> vector<2x16x24xf32>
    %c0_11 = arith.constant 0 : index
    %c0_12 = arith.constant 0 : index
    %c0_13 = arith.constant 0 : index
    %13 = vector.load %arg6[%c0_11, %c0_12, %c0_13] : memref<2x16x1xi8, #tpu.memory_space<vmem>>, vector<2x16x1xi8>
    %c0_i8 = arith.constant 0 : i8
    %14 = vector.broadcast %c0_i8 : i8 to vector<2x16x1xi8>
    %15 = arith.cmpi ne, %13, %14 : vector<2x16x1xi8>
    %cst_14 = arith.constant -1.000000e+04 : f32
    %16 = vector.shape_cast %15 : vector<2x16x1xi1> to vector<2x16x1xi1>
    %17 = vector.broadcast %16 : vector<2x16x1xi1> to vector<2x16x24xi1>
    %18 = vector.broadcast %cst_14 : f32 to vector<2x16x24xf32>
    %19 = arith.select %17, %12, %18 : vector<2x16x24xi1>, vector<2x16x24xf32>
    %c0_15 = arith.constant 0 : index
    %c0_16 = arith.constant 0 : index
    %c0_17 = arith.constant 0 : index
    %20 = vector.load %arg7[%c0_15, %c0_16, %c0_17] : memref<2x1x24xi8, #tpu.memory_space<vmem>>, vector<2x1x24xi8>
    %c0_i8_18 = arith.constant 0 : i8
    %21 = vector.broadcast %c0_i8_18 : i8 to vector<2x1x24xi8>
    %22 = arith.cmpi ne, %20, %21 : vector<2x1x24xi8>
    %cst_19 = arith.constant -1.000000e+04 : f32
    %23 = vector.shape_cast %22 : vector<2x1x24xi1> to vector<2x1x24xi1>
    %24 = vector.broadcast %23 : vector<2x1x24xi1> to vector<2x16x24xi1>
    %25 = vector.broadcast %cst_19 : f32 to vector<2x16x24xf32>
    %26 = arith.select %24, %19, %25 : vector<2x16x24xi1>, vector<2x16x24xf32>
    %cst_20 = arith.constant dense<0xFF800000> : vector<2x16xf32>
    %27 = vector.multi_reduction <maximumf>, %26, %cst_20 [2] : vector<2x16x24xf32> to vector<2x16xf32>
    %28 = vector.shape_cast %27 : vector<2x16xf32> to vector<2x16x1xf32>
    %29 = vector.broadcast %28 : vector<2x16x1xf32> to vector<2x16x24xf32>
    %30 = arith.subf %26, %29 : vector<2x16x24xf32>
    %31 = math.exp %30 : vector<2x16x24xf32>
    %cst_21 = arith.constant dense<0.000000e+00> : vector<2x16xf32>
    %32 = vector.multi_reduction <add>, %31, %cst_21 [2] : vector<2x16x24xf32> to vector<2x16xf32>
    %33 = vector.shape_cast %32 : vector<2x16xf32> to vector<2x16x1xf32>
    %34 = vector.broadcast %33 : vector<2x16x1xf32> to vector<2x16x24xf32>
    %35 = arith.divf %31, %34 : vector<2x16x24xf32>
    %c0_22 = arith.constant 0 : index
    %c0_23 = arith.constant 0 : index
    %c0_24 = arith.constant 0 : index
    %36 = vector.load %arg8[%c0_22, %c0_23, %c0_24] : memref<2x16x24xf32, #tpu.memory_space<vmem>>, vector<2x16x24xf32>
    tpu.vector_store %arg8[%c0_22, %c0_23, %c0_24], %35 {strides = array<i32>} : memref<2x16x24xf32, #tpu.memory_space<vmem>>, vector<2x16x24xf32>,
    return
  }
  func.func @transform_0(%arg0: i32, %arg1: i32) -> (i32, i32, i32) {
    %c0_i32 = arith.constant 0 : i32
    %c0_i32_0 = arith.constant 0 : i32
    return %arg0, %arg1, %c0_i32 : i32, i32, i32
  }
  func.func @transform_1(%arg0: i32, %arg1: i32) -> (i32, i32, i32) {
    %c0_i32 = arith.constant 0 : i32
    %c0_i32_0 = arith.constant 0 : i32
    %c0_i32_1 = arith.constant 0 : i32
    return %arg0, %c0_i32, %c0_i32_0 : i32, i32, i32
  }
  func.func @transform_2(%arg0: i32, %arg1: i32) -> (i32, i32) {
    %c0_i32 = arith.constant 0 : i32
    %c0_i32_0 = arith.constant 0 : i32
    %c0_i32_1 = arith.constant 0 : i32
    return %c0_i32, %c0_i32_0 : i32, i32
  }
  func.func @transform_3(%arg0: i32, %arg1: i32) -> (i32, i32) {
    %c0_i32 = arith.constant 0 : i32
    %c0_i32_0 = arith.constant 0 : i32
    %c0_i32_1 = arith.constant 0 : i32
    return %c0_i32, %c0_i32_0 : i32, i32
  }
  func.func @transform_4(%arg0: i32, %arg1: i32) -> (i32, i32, i32) {
    %c0_i32 = arith.constant 0 : i32
    %c0_i32_0 = arith.constant 0 : i32
    return %arg0, %arg1, %c0_i32 : i32, i32, i32
  }
  func.func @transform_5(%arg0: i32, %arg1: i32) -> (i32, i32, i32) {
    %c0_i32 = arith.constant 0 : i32
    %c0_i32_0 = arith.constant 0 : i32
    %c0_i32_1 = arith.constant 0 : i32
    return %arg0, %c0_i32, %c0_i32_0 : i32, i32, i32
  }
  func.func @transform_6(%arg0: i32, %arg1: i32) -> (i32, i32, i32) {
    %c0_i32 = arith.constant 0 : i32
    %c0_i32_0 = arith.constant 0 : i32
    return %arg0, %arg1, %c0_i32 : i32, i32, i32
  }
}

</mosaic_0001>

<llo_original>
// kernel: tpu_custom_call.1
$region0: #{tpu_custom_call.1}
  #allocation0 [shape = 'u32[]', space=smem, size = 0x4, offset = 0x4, fixed_abs, tag = 'smem constant byte address 0x4 - core index']
  #allocation1 [shape = 'u32[144,128]{1,0:T(1,128)}', space=vmem, size = 0x12000, scoped, tag = 'internal scratch']
  %s0 = inlined_call_operand.hbm [shape: f32[2,16,32], index: 0, kind: input, shape index: {}]
  %s1 = inlined_call_operand.hbm [shape: f32[2,24,32], index: 1, kind: input, shape index: {}]
  %s2 = inlined_call_operand.hbm [shape: f32[32,32], index: 2, kind: input, shape index: {}]
  %s3 = inlined_call_operand.vmem [shape: f32[1,32], index: 3, kind: input, shape index: {}]
  %s4 = inlined_call_operand.vmem [shape: s8[2,16,1], index: 4, kind: input, shape index: {}]
  %s5 = inlined_call_operand.vmem [shape: s8[2,1,24], index: 5, kind: input, shape index: {}]
  %s6 = inlined_call_operand.hbm [shape: f32[2,16,24], index: 6, kind: output, shape index: {}]
  %s7 = sld [smem:[#allocation0]]
  $region46: #{tpu_custom_call.1} parent=0
    _
  %s9 = ssub.s32 1, %s7
  %s10 = scalar_select 0, %s9, %s7
  $region1: #{tpu_custom_call.1} parent=0
    #allocation2 [shape = 'u8[16384]{0}', space=vmem, size = 0x4000, scoped, tag = 'input window, operand 0, single buffered']
    #allocation3 [shape = 's32[1]{0}', space=sflag, size = 0x4, scoped, tag = 'scoped memory for tpu_custom_call.1']
    #allocation4 [shape = 's32[1]{0}', space=sflag, size = 0x4, scoped, tag = 'scoped memory for tpu_custom_call.1']
    #allocation5 [shape = 'u8[24576]{0}', space=vmem, size = 0x6000, scoped, tag = 'input window, operand 1, single buffered']
    #allocation6 [shape = 's32[1]{0}', space=sflag, size = 0x4, scoped, tag = 'scoped memory for tpu_custom_call.1']
    #allocation7 [shape = 'u8[16384]{0}', space=vmem, size = 0x4000, scoped, tag = 'input window, operand 2, single buffered']
    #allocation8 [shape = 'u8[16384]{0}', space=vmem, size = 0x4000, scoped, tag = 'output window, operand 0, single buffered']
    %11 = vsyncpa [#allocation3], 0
    %12 = vsyncpa [#allocation6], 0
    %13 = vsyncpa [#allocation4], 0
    // Predicated region
    $region2: #{tpu_custom_call.1} parent=1 // pred_check
      _
    $region3: #{tpu_custom_call.1} parent=1 // pred_check_branch
      %15 = sbr.rel (0) target = $region5
    $region4: #{tpu_custom_call.1} parent=1 // pred_region
      %s17 = ssub.s32 512, 512
      %18 = vsyncadd [#allocation3], %s17
      %s19 = sshll.u32 [#allocation2], 4
      %s20 = int_to_ptr.vmem [resolvable:$true] %s19
      %25 = dma.hbm_to_vmem [thread:$0]  %s0, 512, %s20, [#allocation3], 128, 128, 8
    $region5: #{tpu_custom_call.1} parent=1 // pred_fallthru
      _
    // Predicated region
    $region6: #{tpu_custom_call.1} parent=1 // pred_check
      _
    $region7: #{tpu_custom_call.1} parent=1 // pred_check_branch
      %27 = sbr.rel (0) target = $region9
    $region8: #{tpu_custom_call.1} parent=1 // pred_region
      %s29 = ssub.s32 768, 768
      %30 = vsyncadd [#allocation6], %s29
      %s31 = sshll.u32 [#allocation5], 4
      %s32 = int_to_ptr.vmem [resolvable:$true] %s31
      %37 = dma.hbm_to_vmem [thread:$0]  %s1, 768, %s32, [#allocation6], 128, 128, 8
    $region9: #{tpu_custom_call.1} parent=1 // pred_fallthru
      _
    // Predicated region
    $region10: #{tpu_custom_call.1} parent=1 // pred_check
      _
    $region11: #{tpu_custom_call.1} parent=1 // pred_check_branch
      %39 = sbr.rel (0) target = $region13
    $region12: #{tpu_custom_call.1} parent=1 // pred_region
      %s41 = ssub.s32 512, 512
      %42 = vsyncadd [#allocation6], %s41
      %s43 = sshll.u32 [#allocation7], 4
      %s44 = int_to_ptr.vmem [resolvable:$true] %s43
      %49 = dma.hbm_to_vmem [thread:$0]  %s2, 512, %s44, [#allocation6], 128, 128, 8
    $region13: #{tpu_custom_call.1} parent=1 // pred_fallthru
      _
    // Predicated region
    $region14: #{tpu_custom_call.1} parent=1 // pred_check
      _
    $region15: #{tpu_custom_call.1} parent=1 // pred_check_branch
      %51 = sbr.rel (0) target = $region17
    $region16: #{tpu_custom_call.1} parent=1 // pred_region
      _
    $region17: #{tpu_custom_call.1} parent=1 // pred_fallthru
      _
    // Predicated region
    $region18: #{tpu_custom_call.1} parent=1 // pred_check
      _
    $region19: #{tpu_custom_call.1} parent=1 // pred_check_branch
      %53 = sbr.rel (0) target = $region21
    $region20: #{tpu_custom_call.1} parent=1 // pred_region
      _
    $region21: #{tpu_custom_call.1} parent=1 // pred_fallthru
      _
    // Predicated region
    $region22: #{tpu_custom_call.1} parent=1 // pred_check
      _
    $region23: #{tpu_custom_call.1} parent=1 // pred_check_branch
      %55 = sbr.rel (0) target = $region25
    $region24: #{tpu_custom_call.1} parent=1 // pred_region
      _
    $region25: #{tpu_custom_call.1} parent=1 // pred_fallthru
      _
    // Predicated region
    $region26: #{tpu_custom_call.1} parent=1 // pred_check
      _
    $region27: #{tpu_custom_call.1} parent=1 // pred_check_branch
      %57 = sbr.rel (0) target = $region29
    $region28: #{tpu_custom_call.1} parent=1 // pred_region
      %58 = dma.done [#allocation3], 512
    $region29: #{tpu_custom_call.1} parent=1 // pred_fallthru
      _
    // Predicated region
    $region30: #{tpu_custom_call.1} parent=1 // pred_check
      _
    $region31: #{tpu_custom_call.1} parent=1 // pred_check_branch
      %60 = sbr.rel (0) target = $region33
    $region32: #{tpu_custom_call.1} parent=1 // pred_region
      %61 = dma.done [#allocation6], 768
    $region33: #{tpu_custom_call.1} parent=1 // pred_fallthru
      _
    // Predicated region
    $region34: #{tpu_custom_call.1} parent=1 // pred_check
      _
    $region35: #{tpu_custom_call.1} parent=1 // pred_check_branch
      %63 = sbr.rel (0) target = $region37
    $region36: #{tpu_custom_call.1} parent=1 // pred_region
      %64 = dma.done [#allocation6], 512
    $region37: #{tpu_custom_call.1} parent=1 // pred_fallthru
      _
    %v67 = vld [vmem:[#allocation7] sm:$0xff]
    %v68 = vld [vmem:[#allocation7 + $0x8] sm:$0xff]
    %v69 = vld [vmem:[#allocation7 + $0x10] sm:$0xff]
    %v70 = vld [vmem:[#allocation7 + $0x18] sm:$0xff]
    %v71 = vld [vmem:[%s3] sm:$0x1]
    %v72 = vld [vmem:[#allocation2] sm:$0xff]
    %v73 = vld [vmem:[#allocation2 + $0x8] sm:$0xff]
    %v74 = vld [vmem:[#allocation2 + $0x10] sm:$0xff]
    %v75 = vld [vmem:[#allocation2 + $0x18] sm:$0xff]
    %v77 = vlaneseq
    %v78 = vshrl.u32 %v77, 7
    %v79 = vsub.s32 0, %v78
    %v80 = vrot.slane %v71, %v79
    %vm82 = vcmask 261120
    %v84 = vsel %vm82, %v72, 0
    %v87 = vsel %vm82, %v73, 0
    %v90 = vsel %vm82, %v74, 0
    %v93 = vsel %vm82, %v75, 0
    %95 = vmatprep.subr.mxu0 0.0
    %96 = vmatpush1.msra.mxu0 0.0
    %97 = vmatprep.subr.mxu0 0.0
    %98 = vmatpush1.msra.mxu0 0.0
    %99 = vmatprep.subr.mxu0 0.0
    %100 = vmatpush1.msra.mxu0 0.0
    %101 = vmatprep.subr.mxu0 0.0
    %102 = vmatpush1.msra.mxu0 0.0
    %103 = vmatprep.subr.mxu0 0.0
    %104 = vmatpush1.msra.mxu0 0.0
    %105 = vmatprep.subr.mxu0 0.0
    %106 = vmatpush1.msra.mxu0 0.0
    %107 = vmatprep.subr.mxu0 0.0
    %108 = vmatpush1.msra.mxu0 0.0
    %109 = vmatprep.subr.mxu0 0.0
    %110 = vmatpush1.msra.mxu0 0.0
    %111 = vmatprep.subr.mxu0 0.0
    %112 = vmatpush1.msra.mxu0 0.0
    %113 = vmatprep.subr.mxu0 0.0
    %114 = vmatpush1.msra.mxu0 0.0
    %115 = vmatprep.subr.mxu0 0.0
    %116 = vmatpush1.msra.mxu0 0.0
    %117 = vmatprep.subr.mxu0 0.0
    %118 = vmatpush1.msra.mxu0 0.0
    %119 = vmatprep.subr.mxu0 0.0
    %120 = vmatpush1.msra.mxu0 %v70
    %121 = vmatprep.subr.mxu0 0.0
    %122 = vmatpush1.msra.mxu0 %v69
    %123 = vmatprep.subr.mxu0 0.0
    %124 = vmatpush1.msra.mxu0 %v68
    %125 = vmatprep.subr.mxu0 0.0
    %126 = vmatpush1.msra.mxu0 %v67
    %127 = vmatprep.subr.mxu0 0.0
    %128 = vmatpush2.msra.mxu0 0.0
    %129 = vmatprep.subr.mxu0 0.0
    %130 = vmatpush2.msra.mxu0 0.0
    %131 = vmatprep.subr.mxu0 0.0
    %132 = vmatpush2.msra.mxu0 0.0
    %133 = vmatprep.subr.mxu0 0.0
    %134 = vmatpush2.msra.mxu0 0.0
    %135 = vmatprep.subr.mxu0 0.0
    %136 = vmatpush2.msra.mxu0 0.0
    %137 = vmatprep.subr.mxu0 0.0
    %138 = vmatpush2.msra.mxu0 0.0
    %139 = vmatprep.subr.mxu0 0.0
    %140 = vmatpush2.msra.mxu0 0.0
    %141 = vmatprep.subr.mxu0 0.0
    %142 = vmatpush2.msra.mxu0 0.0
    %143 = vmatprep.subr.mxu0 0.0
    %144 = vmatpush2.msra.mxu0 0.0
    %145 = vmatprep.subr.mxu0 0.0
    %146 = vmatpush2.msra.mxu0 0.0
    %147 = vmatprep.subr.mxu0 0.0
    %148 = vmatpush2.msra.mxu0 0.0
    %149 = vmatprep.subr.mxu0 0.0
    %150 = vmatpush2.msra.mxu0 0.0
    %151 = vmatprep.subr.mxu0 0.0
    %152 = vmatpush2.msra.mxu0 0.0
    %153 = vmatprep.subr.mxu0 0.0
    %154 = vmatpush2.msra.mxu0 0.0
    %155 = vmatprep.subr.mxu0 0.0
    %156 = vmatpush2.msra.mxu0 0.0
    %157 = vmatprep.subr.mxu0 0.0
    %158 = vmatpush2.msra.mxu0 0.0
    %159 = vmatprep.mubr.f32.mxu0 0.0
    %160 = vmatmul.mubr.f32.gmra.mxu0 %v84
    %v161 = vpop.f32.mrf.mxu0
    %v162 = vadd.f32 %v80, %v161
    %v163 = vpop.f32.mrf.mxu0
    %164 = vmatprep.mubr.f32.mxu0 0.0
    %165 = vmatmul.mubr.f32.gmra.mxu0 %v87
    %v166 = vpop.f32.mrf.mxu0
    %v167 = vadd.f32 %v80, %v166
    %v168 = vpop.f32.mrf.mxu0
    %169 = vmatprep.mubr.f32.mxu0 0.0
    %170 = vmatmul.mubr.f32.gmra.mxu0 %v90
    %v171 = vpop.f32.mrf.mxu0
    %v172 = vadd.f32 %v80, %v171
    %v173 = vpop.f32.mrf.mxu0
    %174 = vmatprep.mubr.f32.mxu0 0.0
    %175 = vmatmul.mubr.f32.gmra.mxu0 %v93
    %v176 = vpop.f32.mrf.mxu0
    %v177 = vadd.f32 %v80, %v176
    %v178 = vpop.f32.mrf.mxu0
    %179 = vdwg.mxu0
    %v180 = vld [vmem:[#allocation5] sm:$0xff]
    %v181 = vld [vmem:[#allocation5 + $0x8] sm:$0xff]
    %v182 = vld [vmem:[#allocation5 + $0x10] sm:$0xff]
    %v183 = vld [vmem:[#allocation5 + $0x18] sm:$0xff]
    %v184 = vld [vmem:[#allocation5 + $0x20] sm:$0xff]
    %v185 = vld [vmem:[#allocation5 + $0x28] sm:$0xff]
    %v187 = vsel %vm82, %v180, 0
    %v190 = vsel %vm82, %v181, 0
    %v193 = vsel %vm82, %v182, 0
    %v196 = vsel %vm82, %v183, 0
    %v199 = vsel %vm82, %v184, 0
    %v202 = vsel %vm82, %v185, 0
    %204 = vmatprep.subr.mxu0 0.0
    %205 = vmatpush1.msra.mxu0 0.0
    %206 = vmatprep.subr.mxu0 0.0
    %207 = vmatpush1.msra.mxu0 0.0
    %208 = vmatprep.subr.mxu0 0.0
    %209 = vmatpush1.msra.mxu0 0.0
    %210 = vmatprep.subr.mxu0 0.0
    %211 = vmatpush1.msra.mxu0 0.0
    %212 = vmatprep.subr.mxu0 0.0
    %213 = vmatpush1.msra.mxu0 0.0
    %214 = vmatprep.subr.mxu0 0.0
    %215 = vmatpush1.msra.mxu0 0.0
    %216 = vmatprep.subr.mxu0 0.0
    %217 = vmatpush1.msra.mxu0 0.0
    %218 = vmatprep.subr.mxu0 0.0
    %219 = vmatpush1.msra.mxu0 0.0
    %220 = vmatprep.subr.mxu0 0.0
    %221 = vmatpush1.msra.mxu0 0.0
    %222 = vmatprep.subr.mxu0 0.0
    %223 = vmatpush1.msra.mxu0 0.0
    %224 = vmatprep.subr.mxu0 0.0
    %225 = vmatpush1.msra.mxu0 0.0
    %226 = vmatprep.subr.mxu0 0.0
    %227 = vmatpush1.msra.mxu0 0.0
    %228 = vmatprep.subr.mxu0 0.0
    %229 = vmatpush1.msra.mxu0 %v70
    %230 = vmatprep.subr.mxu0 0.0
    %231 = vmatpush1.msra.mxu0 %v69
    %232 = vmatprep.subr.mxu0 0.0
    %233 = vmatpush1.msra.mxu0 %v68
    %234 = vmatprep.subr.mxu0 0.0
    %235 = vmatpush1.msra.mxu0 %v67
    %236 = vmatprep.subr.mxu0 0.0
    %237 = vmatpush2.msra.mxu0 0.0
    %238 = vmatprep.subr.mxu0 0.0
    %239 = vmatpush2.msra.mxu0 0.0
    %240 = vmatprep.subr.mxu0 0.0
    %241 = vmatpush2.msra.mxu0 0.0
    %242 = vmatprep.subr.mxu0 0.0
    %243 = vmatpush2.msra.mxu0 0.0
    %244 = vmatprep.subr.mxu0 0.0
    %245 = vmatpush2.msra.mxu0 0.0
    %246 = vmatprep.subr.mxu0 0.0
    %247 = vmatpush2.msra.mxu0 0.0
    %248 = vmatprep.subr.mxu0 0.0
    %249 = vmatpush2.msra.mxu0 0.0
    %250 = vmatprep.subr.mxu0 0.0
    %251 = vmatpush2.msra.mxu0 0.0
    %252 = vmatprep.subr.mxu0 0.0
    %253 = vmatpush2.msra.mxu0 0.0
    %254 = vmatprep.subr.mxu0 0.0
    %255 = vmatpush2.msra.mxu0 0.0
    %256 = vmatprep.subr.mxu0 0.0
    %257 = vmatpush2.msra.mxu0 0.0
    %258 = vmatprep.subr.mxu0 0.0
    %259 = vmatpush2.msra.mxu0 0.0
    %260 = vmatprep.subr.mxu0 0.0
    %261 = vmatpush2.msra.mxu0 0.0
    %262 = vmatprep.subr.mxu0 0.0
    %263 = vmatpush2.msra.mxu0 0.0
    %264 = vmatprep.subr.mxu0 0.0
    %265 = vmatpush2.msra.mxu0 0.0
    %266 = vmatprep.subr.mxu0 0.0
    %267 = vmatpush2.msra.mxu0 0.0
    %268 = vmatprep.mubr.f32.mxu0 0.0
    %269 = vmatmul.mubr.f32.gmra.mxu0 %v187
    %v270 = vpop.f32.mrf.mxu0
    %v271 = vadd.f32 %v80, %v270
    %v272 = vpop.f32.mrf.mxu0
    %273 = vmatprep.mubr.f32.mxu0 0.0
    %274 = vmatmul.mubr.f32.gmra.mxu0 %v190
    %v275 = vpop.f32.mrf.mxu0
    %v276 = vadd.f32 %v80, %v275
    %v277 = vpop.f32.mrf.mxu0
    %278 = vmatprep.mubr.f32.mxu0 0.0
    %279 = vmatmul.mubr.f32.gmra.mxu0 %v193
    %v280 = vpop.f32.mrf.mxu0
    %v281 = vadd.f32 %v80, %v280
    %v282 = vpop.f32.mrf.mxu0
    %283 = vmatprep.mubr.f32.mxu0 0.0
    %284 = vmatmul.mubr.f32.gmra.mxu0 %v196
    %v285 = vpop.f32.mrf.mxu0
    %v286 = vadd.f32 %v80, %v285
    %v287 = vpop.f32.mrf.mxu0
    %288 = vmatprep.mubr.f32.mxu0 0.0
    %289 = vmatmul.mubr.f32.gmra.mxu0 %v199
    %v290 = vpop.f32.mrf.mxu0
    %v291 = vadd.f32 %v80, %v290
    %v292 = vpop.f32.mrf.mxu0
    %293 = vmatprep.mubr.f32.mxu0 0.0
    %294 = vmatmul.mubr.f32.gmra.mxu0 %v202
    %v295 = vpop.f32.mrf.mxu0
    %v296 = vadd.f32 %v80, %v295
    %v297 = vpop.f32.mrf.mxu0
    %298 = vdwg.mxu0
    %v300 = vsel %vm82, %v162, 0
    %v303 = vsel %vm82, %v167, 0
    %v306 = vsel %vm82, %v271, 0
    %v309 = vsel %vm82, %v276, 0
    %v312 = vsel %vm82, %v281, 0
    %314 = vmatprep.subr.mxu0 0.0
    %315 = vmatpush1.xpose.msra.mxu0 0.0
    %316 = vmatprep.subr.mxu0 0.0
    %317 = vmatpush1.xpose.msra.mxu0 0.0
    %318 = vmatprep.subr.mxu0 0.0
    %319 = vmatpush1.xpose.msra.mxu0 0.0
    %320 = vmatprep.subr.mxu0 0.0
    %321 = vmatpush1.xpose.msra.mxu0 0.0
    %322 = vmatprep.subr.mxu0 0.0
    %323 = vmatpush1.xpose.msra.mxu0 0.0
    %324 = vmatprep.subr.mxu0 0.0
    %325 = vmatpush1.xpose.msra.mxu0 0.0
    %326 = vmatprep.subr.mxu0 0.0
    %327 = vmatpush1.xpose.msra.mxu0 0.0
    %328 = vmatprep.subr.mxu0 0.0
    %329 = vmatpush1.xpose.msra.mxu0 0.0
    %330 = vmatprep.subr.mxu0 0.0
    %331 = vmatpush1.xpose.msra.mxu0 0.0
    %332 = vmatprep.subr.mxu0 0.0
    %333 = vmatpush1.xpose.msra.mxu0 0.0
    %334 = vmatprep.subr.mxu0 0.0
    %335 = vmatpush1.xpose.msra.mxu0 0.0
    %336 = vmatprep.subr.mxu0 0.0
    %337 = vmatpush1.xpose.msra.mxu0 0.0
    %338 = vmatprep.subr.mxu0 0.0
    %339 = vmatpush1.xpose.msra.mxu0 0.0
    %340 = vmatprep.subr.mxu0 0.0
    %341 = vmatpush1.xpose.msra.mxu0 %v312
    %342 = vmatprep.subr.mxu0 0.0
    %343 = vmatpush1.xpose.msra.mxu0 %v309
    %344 = vmatprep.subr.mxu0 0.0
    %345 = vmatpush1.xpose.msra.mxu0 %v306
    %346 = vmatprep.subr.mxu0 0.0
    %347 = vmatpush2.xpose.msra.mxu0 0.0
    %348 = vmatprep.subr.mxu0 0.0
    %349 = vmatpush2.xpose.msra.mxu0 0.0
    %350 = vmatprep.subr.mxu0 0.0
    %351 = vmatpush2.xpose.msra.mxu0 0.0
    %352 = vmatprep.subr.mxu0 0.0
    %353 = vmatpush2.xpose.msra.mxu0 0.0
    %354 = vmatprep.subr.mxu0 0.0
    %355 = vmatpush2.xpose.msra.mxu0 0.0
    %356 = vmatprep.subr.mxu0 0.0
    %357 = vmatpush2.xpose.msra.mxu0 0.0
    %358 = vmatprep.subr.mxu0 0.0
    %359 = vmatpush2.xpose.msra.mxu0 0.0
    %360 = vmatprep.subr.mxu0 0.0
    %361 = vmatpush2.xpose.msra.mxu0 0.0
    %362 = vmatprep.subr.mxu0 0.0
    %363 = vmatpush2.xpose.msra.mxu0 0.0
    %364 = vmatprep.subr.mxu0 0.0
    %365 = vmatpush2.xpose.msra.mxu0 0.0
    %366 = vmatprep.subr.mxu0 0.0
    %367 = vmatpush2.xpose.msra.mxu0 0.0
    %368 = vmatprep.subr.mxu0 0.0
    %369 = vmatpush2.xpose.msra.mxu0 0.0
    %370 = vmatprep.subr.mxu0 0.0
    %371 = vmatpush2.xpose.msra.mxu0 0.0
    %372 = vmatprep.subr.mxu0 0.0
    %373 = vmatpush2.xpose.msra.mxu0 0.0
    %374 = vmatprep.subr.mxu0 0.0
    %375 = vmatpush2.xpose.msra.mxu0 0.0
    %376 = vmatprep.subr.mxu0 0.0
    %377 = vmatpush2.xpose.msra.mxu0 0.0
    %378 = vmatprep.mubr.f32.mxu0 0.0
    %379 = vmatmul.mubr.f32.gmra.mxu0 %v300
    %v380 = vpop.f32.mrf.mxu0
    %v381 = vadd.f32 0.0, %v380
    %v382 = vpop.f32.mrf.mxu0
    %383 = vmatprep.mubr.f32.mxu0 0.0
    %384 = vmatmul.mubr.f32.gmra.mxu0 %v303
    %v385 = vpop.f32.mrf.mxu0
    %v386 = vadd.f32 0.0, %v385
    %v387 = vpop.f32.mrf.mxu0
    %388 = vdwg.mxu0
    %v390 = vsel %vm82, %v172, 0
    %v393 = vsel %vm82, %v177, 0
    %v396 = vsel %vm82, %v286, 0
    %v399 = vsel %vm82, %v291, 0
    %v402 = vsel %vm82, %v296, 0
    %404 = vmatprep.subr.mxu0 0.0
    %405 = vmatpush1.xpose.msra.mxu0 0.0
    %406 = vmatprep.subr.mxu0 0.0
    %407 = vmatpush1.xpose.msra.mxu0 0.0
    %408 = vmatprep.subr.mxu0 0.0
    %409 = vmatpush1.xpose.msra.mxu0 0.0
    %410 = vmatprep.subr.mxu0 0.0
    %411 = vmatpush1.xpose.msra.mxu0 0.0
    %412 = vmatprep.subr.mxu0 0.0
    %413 = vmatpush1.xpose.msra.mxu0 0.0
    %414 = vmatprep.subr.mxu0 0.0
    %415 = vmatpush1.xpose.msra.mxu0 0.0
    %416 = vmatprep.subr.mxu0 0.0
    %417 = vmatpush1.xpose.msra.mxu0 0.0
    %418 = vmatprep.subr.mxu0 0.0
    %419 = vmatpush1.xpose.msra.mxu0 0.0
    %420 = vmatprep.subr.mxu0 0.0
    %421 = vmatpush1.xpose.msra.mxu0 0.0
    %422 = vmatprep.subr.mxu0 0.0
    %423 = vmatpush1.xpose.msra.mxu0 0.0
    %424 = vmatprep.subr.mxu0 0.0
    %425 = vmatpush1.xpose.msra.mxu0 0.0
    %426 = vmatprep.subr.mxu0 0.0
    %427 = vmatpush1.xpose.msra.mxu0 0.0
    %428 = vmatprep.subr.mxu0 0.0
    %429 = vmatpush1.xpose.msra.mxu0 0.0
    %430 = vmatprep.subr.mxu0 0.0
    %431 = vmatpush1.xpose.msra.mxu0 %v402
    %432 = vmatprep.subr.mxu0 0.0
    %433 = vmatpush1.xpose.msra.mxu0 %v399
    %434 = vmatprep.subr.mxu0 0.0
    %435 = vmatpush1.xpose.msra.mxu0 %v396
    %436 = vmatprep.subr.mxu0 0.0
    %437 = vmatpush2.xpose.msra.mxu0 0.0
    %438 = vmatprep.subr.mxu0 0.0
    %439 = vmatpush2.xpose.msra.mxu0 0.0
    %440 = vmatprep.subr.mxu0 0.0
    %441 = vmatpush2.xpose.msra.mxu0 0.0
    %442 = vmatprep.subr.mxu0 0.0
    %443 = vmatpush2.xpose.msra.mxu0 0.0
    %444 = vmatprep.subr.mxu0 0.0
    %445 = vmatpush2.xpose.msra.mxu0 0.0
    %446 = vmatprep.subr.mxu0 0.0
    %447 = vmatpush2.xpose.msra.mxu0 0.0
    %448 = vmatprep.subr.mxu0 0.0
    %449 = vmatpush2.xpose.msra.mxu0 0.0
    %450 = vmatprep.subr.mxu0 0.0
    %451 = vmatpush2.xpose.msra.mxu0 0.0
    %452 = vmatprep.subr.mxu0 0.0
    %453 = vmatpush2.xpose.msra.mxu0 0.0
    %454 = vmatprep.subr.mxu0 0.0
    %455 = vmatpush2.xpose.msra.mxu0 0.0
    %456 = vmatprep.subr.mxu0 0.0
    %457 = vmatpush2.xpose.msra.mxu0 0.0
    %458 = vmatprep.subr.mxu0 0.0
    %459 = vmatpush2.xpose.msra.mxu0 0.0
    %460 = vmatprep.subr.mxu0 0.0
    %461 = vmatpush2.xpose.msra.mxu0 0.0
    %462 = vmatprep.subr.mxu0 0.0
    %463 = vmatpush2.xpose.msra.mxu0 0.0
    %464 = vmatprep.subr.mxu0 0.0
    %465 = vmatpush2.xpose.msra.mxu0 0.0
    %466 = vmatprep.subr.mxu0 0.0
    %467 = vmatpush2.xpose.msra.mxu0 0.0
    %468 = vmatprep.mubr.f32.mxu0 0.0
    %469 = vmatmul.mubr.f32.gmra.mxu0 %v390
    %v470 = vpop.f32.mrf.mxu0
    %v471 = vadd.f32 0.0, %v470
    %v472 = vpop.f32.mrf.mxu0
    %473 = vmatprep.mubr.f32.mxu0 0.0
    %474 = vmatmul.mubr.f32.gmra.mxu0 %v393
    %v475 = vpop.f32.mrf.mxu0
    %v476 = vadd.f32 0.0, %v475
    %v477 = vpop.f32.mrf.mxu0
    %478 = vdwg.mxu0
    %v479 = vld [vmem:[%s4] sm:$0x3]
    %v480 = vld [vmem:[%s4 + $0x2] sm:$0x3]
    %v481 = vld [vmem:[%s4 + $0x4] sm:$0x3]
    %v482 = vld [vmem:[%s4 + $0x6] sm:$0x3]
    %vm483 = vnez %v479
    %vm484 = vnez %v480
    %vm485 = vnez %v481
    %vm486 = vnez %v482
    %v487 = vsel %vm483, 16843009, 0
    %v488 = vsel %vm484, 16843009, 0
    %v489 = vsel %vm485, 16843009, 0
    %v490 = vsel %vm486, 16843009, 0
    %v491 = vunpack.c.0.s8 %v487
    %v492 = vunpack.c.0.s8 %v488
    %v493 = vunpack.c.0.s8 %v489
    %v494 = vunpack.c.0.s8 %v490
    %vm495 = vcmp.ne.s32.totalorder %v491, 0
    %vm496 = vcmp.ne.s32.totalorder %v492, 0
    %vm497 = vcmp.ne.s32.totalorder %v493, 0
    %vm498 = vcmp.ne.s32.totalorder %v494, 0
    %v499 = vsel %vm495, 1, 0
    %v500 = vsel %vm496, 1, 0
    %v501 = vsel %vm497, 1, 0
    %v502 = vsel %vm498, 1, 0
    %503 = vset.pattern.permute.xlu0 0
    %504 = vperm.xlu0 %503, %v499
    %v505 = vpop.permute.xlu0 %504
    %506 = vset.pattern.permute.xlu0 0
    %507 = vperm.xlu0 %506, %v500
    %v508 = vpop.permute.xlu0 %507
    %509 = vset.pattern.permute.xlu0 0
    %510 = vperm.xlu0 %509, %v501
    %v511 = vpop.permute.xlu0 %510
    %512 = vset.pattern.permute.xlu0 0
    %513 = vperm.xlu0 %512, %v502
    %v514 = vpop.permute.xlu0 %513
    %vm515 = vcmp.eq.s32.totalorder %v505, 1
    %vm516 = vcmp.eq.s32.totalorder %v508, 1
    %vm517 = vcmp.eq.s32.totalorder %v511, 1
    %vm518 = vcmp.eq.s32.totalorder %v514, 1
    %v519 = vsel %vm515, %v381, -10000.0
    %v520 = vsel %vm516, %v386, -10000.0
    %v521 = vsel %vm517, %v471, -10000.0
    %v522 = vsel %vm518, %v476, -10000.0
    %v523 = vld [vmem:[%s5] sm:$0x1]
    %v524 = vld [vmem:[%s5 + $0x1] sm:$0x1]
    %vm525 = vnez %v523
    %vm526 = vnez %v524
    %v527 = vsel %vm525, 16843009, 0
    %v528 = vsel %vm526, 16843009, 0
    %v529 = vunpack.c.0.s8 %v527
    %v530 = vunpack.c.0.s8 %v528
    %vm531 = vcmp.ne.s32.totalorder %v529, 0
    %vm532 = vcmp.ne.s32.totalorder %v530, 0
    %v533 = vsel %vm531, 1, 0
    %v534 = vsel %vm532, 1, 0
    %v535 = vlaneseq
    %v536 = vshrl.u32 %v535, 7
    %v537 = vsub.s32 0, %v536
    %v538 = vrot.slane %v533, %v537
    %v539 = vlaneseq
    %v540 = vshrl.u32 %v539, 7
    %v541 = vsub.s32 0, %v540
    %v542 = vrot.slane %v534, %v541
    %vm543 = vcmp.eq.s32.totalorder %v538, 1
    %vm544 = vcmp.eq.s32.totalorder %v542, 1
    %v545 = vsel %vm543, %v519, -10000.0
    %v546 = vsel %vm543, %v520, -10000.0
    %v547 = vsel %vm544, %v521, -10000.0
    %v548 = vsel %vm544, %v522, -10000.0
    %vm549 = vcmask 195584
    %v550 = vsel %vm549, %v545, -inf
    %551 = vmax.xlane.f32.xlu0 %v550
    %v552 = vpop.xlane.xlu0 %551
    %v553 = vsel %vm549, %v546, -inf
    %554 = vmax.xlane.f32.xlu0 %v553
    %v555 = vpop.xlane.xlu0 %554
    %v556 = vsel %vm549, %v547, -inf
    %557 = vmax.xlane.f32.xlu0 %v556
    %v558 = vpop.xlane.xlu0 %557
    %v559 = vsel %vm549, %v548, -inf
    %560 = vmax.xlane.f32.xlu0 %v559
    %v561 = vpop.xlane.xlu0 %560
    %v562 = vsub.f32 %v545, %v552
    %v563 = vsub.f32 %v546, %v555
    %v564 = vsub.f32 %v547, %v558
    %v565 = vsub.f32 %v548, %v561
    %v566 = vmul.f32 %v562, 1.442695
    %v567 = vpow.pop %v566
    %v568 = vmul.f32 %v563, 1.442695
    %v569 = vpow.pop %v568
    %v570 = vmul.f32 %v564, 1.442695
    %v571 = vpow.pop %v570
    %v572 = vmul.f32 %v565, 1.442695
    %v573 = vpow.pop %v572
    %v574 = vsel %vm549, %v567, 0.0
    %575 = vadd.xlane.f32.xlu0 %v574
    %v576 = vpop.xlane.xlu0 %575
    %v577 = vsel %vm549, %v569, 0.0
    %578 = vadd.xlane.f32.xlu0 %v577
    %v579 = vpop.xlane.xlu0 %578
    %v580 = vsel %vm549, %v571, 0.0
    %581 = vadd.xlane.f32.xlu0 %v580
    %v582 = vpop.xlane.xlu0 %581
    %v583 = vsel %vm549, %v573, 0.0
    %584 = vadd.xlane.f32.xlu0 %v583
    %v585 = vpop.xlane.xlu0 %584
    %v586 = vrcp.pop %v576
    %v587 = vmul.f32 %v567, %v586
    %v588 = vrcp.pop %v579
    %v589 = vmul.f32 %v569, %v588
    %v590 = vrcp.pop %v582
    %v591 = vmul.f32 %v571, %v590
    %v592 = vrcp.pop %v585
    %v593 = vmul.f32 %v573, %v592
    %594 = vst.msk [vmem:[#allocation8] sm:$0xff] %vm549, %v587
    %595 = vst.msk [vmem:[#allocation8 + $0x8] sm:$0xff] %vm549, %v589
    %596 = vst.msk [vmem:[#allocation8 + $0x10] sm:$0xff] %vm549, %v591
    %597 = vst.msk [vmem:[#allocation8 + $0x18] sm:$0xff] %vm549, %v593
    // Predicated region
    $region38: #{tpu_custom_call.1} parent=1 // pred_check
      _
    $region39: #{tpu_custom_call.1} parent=1 // pred_check_branch
      %599 = sbr.rel (0) target = $region41
    $region40: #{tpu_custom_call.1} parent=1 // pred_region
      %s601 = ssub.s32 512, 512
      %602 = vsyncadd [#allocation4], %s601
      %s603 = sshll.u32 [#allocation8], 4
      %s604 = int_to_ptr.vmem [resolvable:$true] %s603
      %609 = dma.vmem_to_hbm [thread:$0]  %s604, 512, %s6, [#allocation4], 128, 128, 8
    $region41: #{tpu_custom_call.1} parent=1 // pred_fallthru
      _
    // Predicated region
    $region42: #{tpu_custom_call.1} parent=1 // pred_check
      _
    $region43: #{tpu_custom_call.1} parent=1 // pred_check_branch
      %611 = sbr.rel (0) target = $region45
    $region44: #{tpu_custom_call.1} parent=1 // pred_region
      %612 = dma.done [#allocation4], 512
    $region45: #{tpu_custom_call.1} parent=1 // pred_fallthru
      _
    %613 = vsyncpa [#allocation3], 1
    %614 = vsyncpa [#allocation6], 1
    %615 = vsyncpa [#allocation4], 1

</llo_original>
